<compile_context>
chip_gen: v7x
topology: tpu7x:2x2x1
jax: 0.10.0
libtpu: 0.0.40
codegen_flags: <defaults>
</compile_context>

<pallas_src>
import jax
import jax.numpy as jnp
from jax.experimental import pallas as pl
from jax.experimental.pallas import tpu as pltpu

_MiB = 1024 * 1024


def _cdiv(a, b):
    return -(-a // b)


def _round_up(x, m):
    return ((x + m - 1) // m) * m


def _default_vmem_limit_bytes():
    """Generation-aware scoped-VMEM budget: leave headroom on v7x (64 MiB/TC),
    exploit v5e/v6e's 128 MiB."""
    cap = None
    try:
        cap = getattr(pltpu.get_tpu_info(), "vmem_capacity_bytes", None)
    except Exception:
        cap = None
    if not cap:
        cap = 64 * _MiB                       # conservative (v7x per-TC size)
    return int(min(cap - 16 * _MiB, 100 * _MiB))


# --------------------------------------------------------------------------
# Kernels
# --------------------------------------------------------------------------
def _fusion_kernel_scalar_gate(tf_ref, vf_ref, tl_ref, vl_ref,
                               wt_ref, bt_ref, wv_ref, bv_ref,
                               wz_ref, bz_ref,
                               h_ref, alpha_ref, z_sc):
    """alpha_dim == 1: scalar gate per row, cached in z_sc across class tiles."""
    c = pl.program_id(1)

    @pl.when(c == 0)
    def _():
        # text = tanh(text_features @ W_t + b_t), vis = tanh(vis @ W_v + b_v)
        # (bf16 inputs allowed; f32 accumulation / f32 elementwise math).
        text = jnp.tanh(
            jnp.dot(tf_ref[...], wt_ref[...], preferred_element_type=jnp.float32)
            + bt_ref[...])
        vis = jnp.tanh(
            jnp.dot(vf_ref[...], wv_ref[...], preferred_element_type=jnp.float32)
            + bv_ref[...])
        # sigmoid(cat([text, vis]) @ W_z + b_z) with a 1-wide output:
        # fused VPU multiply + single XLU lane reduction (MXU kept free).
        g = text * wz_ref[0:1, :] + vis * wz_ref[1:2, :]
        z_sc[...] = jax.nn.sigmoid(
            jnp.sum(g, axis=-1, keepdims=True) + bz_ref[0, 0])

    z = z_sc[...]                                   # (tile_n, 1) f32
    alpha_ref[...] = z.astype(alpha_ref.dtype)      # narrow (tile_n, 1) output
    tl = tl_ref[...].astype(jnp.float32)
    vl = vl_ref[...].astype(jnp.float32)
    # h = z * tl + (1 - z) * vl  ==  vl + z * (tl - vl)   (2 VALU ops/elem)
    h_ref[...] = (vl + z * (tl - vl)).astype(h_ref.dtype)


def _fusion_kernel_vector_gate(tf_ref, vf_ref, tl_ref, vl_ref,
                               wt_ref, bt_ref, wv_ref, bv_ref,
                               wzt_ref, wzv_ref, bz_ref,
                               h_ref, alpha_ref, text_sc, vis_sc):
    """alpha_dim == num_classes: per-class gates; activations cached across
    class tiles, gate matmul done per class tile with class-tiled W_z."""
    c = pl.program_id(1)

    @pl.when(c == 0)
    def _():
        text_sc[...] = jnp.tanh(
            jnp.dot(tf_ref[...], wt_ref[...], preferred_element_type=jnp.float32)
            + bt_ref[...])
        vis_sc[...] = jnp.tanh(
            jnp.dot(vf_ref[...], wv_ref[...], preferred_element_type=jnp.float32)
            + bv_ref[...])

    z = jax.nn.sigmoid(
        jnp.dot(text_sc[...], wzt_ref[...], preferred_element_type=jnp.float32)
        + jnp.dot(vis_sc[...], wzv_ref[...], preferred_element_type=jnp.float32)
        + bz_ref[...])                              # (tile_n, tile_c) f32
    alpha_ref[...] = z.astype(alpha_ref.dtype)
    tl = tl_ref[...].astype(jnp.float32)
    vl = vl_ref[...].astype(jnp.float32)
    h_ref[...] = (vl + z * (tl - vl)).astype(h_ref.dtype)


# --------------------------------------------------------------------------
# Parameter prep + wrapper
# --------------------------------------------------------------------------
def prepare_params(params, *, feature_dtype=jnp.float32):
    """One-time parameter prep (hoisted out of the per-call path).

    nn.Linear stores weight as (out, in); we pass (in, out) so the kernel does
    x @ W + b.  W_z is split into its text/vis halves so the concat never
    materializes.  feature_dtype=bf16 halves HBM traffic / weight residency on
    v6e/v7x (accumulation stays f32); biases & gating params stay f32.
    """
    D = params["w_t"].shape[-1]
    A = params["b_z"].shape[-1]
    w_z = params["w_z"].T.astype(jnp.float32)                  # (2D, A)
    out = {
        "w_t": params["w_t"].T.astype(feature_dtype),          # (D, D)
        "b_t": params["b_t"].reshape(1, D).astype(jnp.float32),
        "w_v": params["w_v"].T.astype(feature_dtype),          # (D, D)
        "b_v": params["b_v"].reshape(1, D).astype(jnp.float32),
    }
    if A == 1:
        # Packed (2, D): row 0 = text half, row 1 = vis half. Scalar b_z.
        out["wz"] = jnp.concatenate(
            [w_z[:D, 0].reshape(1, D), w_z[D:, 0].reshape(1, D)], axis=0)
        out["b_z"] = params["b_z"].reshape(1, 1).astype(jnp.float32)
    else:
        out["wz_t"] = w_z[:D]                                  # (D, A)
        out["wz_v"] = w_z[D:]                                  # (D, A)
        out["b_z"] = params["b_z"].reshape(1, A).astype(jnp.float32)
    return out


def gated_fusion_logits(text_logits, vis_logits, text_features, vis_features,
                        prepared, *, tile_n=512, tile_c=512,
                        vmem_limit_bytes=None):
    """Pallas implementation of GatedFusionLogits.forward.

    text_logits / vis_logits     : (B, S, C)
    text_features / vis_features : (B, S, D)
    prepared                     : output of prepare_params(params)
    Returns (h, text_weights): (B, S, C) in the logits dtype and
    (B, S, alpha_dim) in f32 (the gate's compute dtype, like the reference).
    """
    B, S, C = text_logits.shape
    D = text_features.shape[-1]
    A = prepared["b_z"].shape[-1]
    if A not in (1, C):
        raise ValueError(
            f"alpha_dim={A} must be 1 or num_classes={C} (same implicit "
            f"broadcast as the PyTorch reference).")

    N = B * S
    out_dtype = text_logits.dtype
    feat_dtype = prepared["w_t"].dtype

    tf = text_features.reshape(N, D).astype(feat_dtype)
    vf = vis_features.reshape(N, D).astype(feat_dtype)
    tl = text_logits.reshape(N, C)
    vl = vis_logits.reshape(N, C)

    # Row tile: multiple of 8 sublanes (or the full row count), capped so the
    # grid has >= 2 row steps when possible (feeds both v7x TensorCores).
    req_n = min(tile_n, _round_up(_cdiv(N, 2), 8))
    tn = N if N <= req_n else max(8, (req_n // 8) * 8)
    # Class tile: multiple of 128 lanes, or the full class axis.
    tc = C if C <= tile_c else max(128, (tile_c // 128) * 128)

    grid = (_cdiv(N, tn), _cdiv(C, tc))   # ragged tails handled by Pallas
    if vmem_limit_bytes is None:
        vmem_limit_bytes = _default_vmem_limit_bytes()

    def _const(shape):
        # Constant block index + single buffer: fetched once, VMEM-resident.
        return pl.BlockSpec(shape, lambda i, c: (0, 0),
                            pipeline_mode=pl.Buffered(1))

    feat_spec = pl.BlockSpec((tn, D), lambda i, c: (i, 0))   # constant over c
    cls_spec = pl.BlockSpec((tn, tc), lambda i, c: (i, c))

    common_in = [
        feat_spec, feat_spec, cls_spec, cls_spec,
        _const((D, D)), _const((1, D)),
        _const((D, D)), _const((1, D)),
    ]
    common_args = (tf, vf, tl, vl,
                   prepared["w_t"], prepared["b_t"],
                   prepared["w_v"], prepared["b_v"])

    if A == 1:
        kernel = _fusion_kernel_scalar_gate
        in_specs = common_in + [
            _const((2, D)),                                        # packed W_z
            pl.BlockSpec(memory_space=pltpu.MemorySpace.SMEM),     # b_z scalar
        ]
        args = common_args + (prepared["wz"], prepared["b_z"])
        out_specs = (cls_spec, pl.BlockSpec((tn, 1), lambda i, c: (i, 0)))
        out_shape = (jax.ShapeDtypeStruct((N, C), out_dtype),
                     jax.ShapeDtypeStruct((N, 1), jnp.float32))
        scratch = [pltpu.VMEM((tn, 1), jnp.float32)]
    else:
        kernel = _fusion_kernel_vector_gate
        in_specs = common_in + [
            pl.BlockSpec((D, tc), lambda i, c: (0, c)),            # wz_t
            pl.BlockSpec((D, tc), lambda i, c: (0, c)),            # wz_v
            pl.BlockSpec((1, tc), lambda i, c: (0, c)),            # b_z
        ]
        args = common_args + (prepared["wz_t"], prepared["wz_v"],
                              prepared["b_z"])
        out_specs = (cls_spec, cls_spec)
        out_shape = (jax.ShapeDtypeStruct((N, C), out_dtype),
                     jax.ShapeDtypeStruct((N, A), jnp.float32))
        scratch = [pltpu.VMEM((tn, D), jnp.float32),
                   pltpu.VMEM((tn, D), jnp.float32)]

    h, alpha = pl.pallas_call(
        kernel,
        grid=grid,
        in_specs=in_specs,
        out_specs=out_specs,
        out_shape=out_shape,
        scratch_shapes=scratch,
        compiler_params=pltpu.CompilerParams(
            dimension_semantics=("parallel", "arbitrary"),
            vmem_limit_bytes=vmem_limit_bytes,
        ),
    )(*args)

    return h.reshape(B, S, C), alpha.reshape(B, S, A)


# --------------------------------------------------------------------------
# Pure-JAX reference + demo
# --------------------------------------------------------------------------
def _reference(text_logits, vis_logits, text_features, vis_features, params):
    text = jnp.tanh(text_features @ params["w_t"].T + params["b_t"])
    vis = jnp.tanh(vis_features @ params["w_v"].T + params["b_v"])
    mm = jnp.concatenate([text, vis], axis=-1)
    w = jax.nn.sigmoid(mm @ params["w_z"].T + params["b_z"])
    h = w * text_logits + (1.0 - w) * vis_logits
    return h, w


if __name__ == "__main__":
    B, S, D, C = 2, 8, 32, 8     # batch, seq, in_size, num_classes
    key = jax.random.PRNGKey(0)
    keys = jax.random.split(key, 16)

    text_logits = jax.random.normal(keys[0], (B, S, C), jnp.float32)
    vis_logits = jax.random.normal(keys[1], (B, S, C), jnp.float32)
    text_features = jax.random.normal(keys[2], (B, S, D), jnp.float32)
    vis_features = jax.random.normal(keys[3], (B, S, D), jnp.float32)

    def make_params(a_dim, ks):
        scale = 0.1
        return {
            "w_t": scale * jax.random.normal(ks[0], (D, D), jnp.float32),
            "b_t": scale * jax.random.normal(ks[1], (D,), jnp.float32),
            "w_v": scale * jax.random.normal(ks[2], (D, D), jnp.float32),
            "b_v": scale * jax.random.normal(ks[3], (D,), jnp.float32),
            "w_z": scale * jax.random.normal(ks[4], (a_dim, 2 * D), jnp.float32),
            "b_z": scale * jax.random.normal(ks[5], (a_dim,), jnp.float32),
        }

    # --- alpha_dim = 1 (module default), f32 streams ----------------------
    params1 = make_params(1, keys[4:10])
    prepared1 = prepare_params(params1)
    h, w = gated_fusion_logits(text_logits, vis_logits,
                               text_features, vis_features, prepared1)
    jax.block_until_ready((h, w))
    h_ref, w_ref = _reference(text_logits, vis_logits,
                              text_features, vis_features, params1)
    assert h.shape == (B, S, C) and w.shape == (B, S, 1)
    assert jnp.allclose(h, h_ref, atol=1e-5, rtol=1e-5)
    assert jnp.allclose(w, w_ref, atol=1e-5, rtol=1e-5)

    # --- alpha_dim = 1, bf16 feature/weight streams (v6e/v7x bandwidth) ---
    prepared1_bf16 = prepare_params(params1, feature_dtype=jnp.bfloat16)
    h_bf, w_bf = gated_fusion_logits(text_logits, vis_logits,
                                     text_features, vis_features,
                                     prepared1_bf16)
    jax.block_until_ready((h_bf, w_bf))
    assert jnp.allclose(h_bf, h_ref, atol=5e-2)
    assert jnp.allclose(w_bf, w_ref, atol=5e-2)

    # --- alpha_dim = C (per-class gates), f32 streams ----------------------
    paramsC = make_params(C, keys[10:16])
    preparedC = prepare_params(paramsC)
    hC, wC = gated_fusion_logits(text_logits, vis_logits,
                                 text_features, vis_features, preparedC)
    jax.block_until_ready((hC, wC))
    hC_ref, wC_ref = _reference(text_logits, vis_logits,
                                text_features, vis_features, paramsC)
    assert hC.shape == (B, S, C) and wC.shape == (B, S, C)
    assert jnp.allclose(hC, hC_ref, atol=1e-5, rtol=1e-5)
    assert jnp.allclose(wC, wC_ref, atol=1e-5, rtol=1e-5)

    print("KERNEL_OK")
</pallas_src>

<mosaic_0001>
module attributes {stable_mosaic.version = 11 : i64} {
  func.func @_fusion_kernel_scalar_gate(%arg0: i32, %arg1: i32, %arg2: memref<8x32xf32, #tpu.memory_space<vmem>>, %arg3: memref<8x32xf32, #tpu.memory_space<vmem>>, %arg4: memref<8x8xf32, #tpu.memory_space<vmem>>, %arg5: memref<8x8xf32, #tpu.memory_space<vmem>>, %arg6: memref<32x32xf32, #tpu.memory_space<vmem>>, %arg7: memref<1x32xf32, #tpu.memory_space<vmem>>, %arg8: memref<32x32xf32, #tpu.memory_space<vmem>>, %arg9: memref<1x32xf32, #tpu.memory_space<vmem>>, %arg10: memref<2x32xf32, #tpu.memory_space<vmem>>, %arg11: memref<1x1xf32, #tpu.memory_space<smem>>, %arg12: memref<8x8xf32, #tpu.memory_space<vmem>>, %arg13: memref<8x1xf32, #tpu.memory_space<vmem>>, %arg14: memref<8x1xf32, #tpu.memory_space<vmem>>) attributes {dimension_semantics = [#tpu.dimension_semantics<parallel>, #tpu.dimension_semantics<arbitrary>], iteration_bounds = array<i64: 2, 1>, scalar_prefetch = 0 : i64, scratch_operands = 1 : i64, tpu.core_type = #tpu.core_type<tc>, window_params = [{transform_indices = @transform_0, window_bounds = array<i64: 8, 32>}, {transform_indices = @transform_1, window_bounds = array<i64: 8, 32>}, {transform_indices = @transform_2, window_bounds = array<i64: 8, 8>}, {transform_indices = @transform_3, window_bounds = array<i64: 8, 8>}, {pipeline_mode = #tpu.pipeline_mode<synchronous>, transform_indices = @transform_4, window_bounds = array<i64: 32, 32>}, {pipeline_mode = #tpu.pipeline_mode<synchronous>, transform_indices = @transform_5, window_bounds = array<i64: 1, 32>}, {pipeline_mode = #tpu.pipeline_mode<synchronous>, transform_indices = @transform_6, window_bounds = array<i64: 32, 32>}, {pipeline_mode = #tpu.pipeline_mode<synchronous>, transform_indices = @transform_7, window_bounds = array<i64: 1, 32>}, {pipeline_mode = #tpu.pipeline_mode<synchronous>, transform_indices = @transform_8, window_bounds = array<i64: 2, 32>}, {transform_indices = @transform_9, window_bounds = array<i64: 1, 1>}, {transform_indices = @transform_10, window_bounds = array<i64: 8, 8>}, {transform_indices = @transform_11, window_bounds = array<i64: 8, 1>}]} {
    %c0_i32 = arith.constant 0 : i32
    %0 = arith.cmpi eq, %arg1, %c0_i32 : i32
    %1 = arith.extui %0 : i1 to i32
    %c0_i32_0 = arith.constant 0 : i32
    %2 = arith.cmpi ne, %1, %c0_i32_0 : i32
    scf.if %2 {
      %c0_10 = arith.constant 0 : index
      %c0_11 = arith.constant 0 : index
      %12 = vector.load %arg2[%c0_10, %c0_11] : memref<8x32xf32, #tpu.memory_space<vmem>>, vector<8x32xf32>
      %c0_12 = arith.constant 0 : index
      %c0_13 = arith.constant 0 : index
      %13 = vector.load %arg6[%c0_12, %c0_13] : memref<32x32xf32, #tpu.memory_space<vmem>>, vector<32x32xf32>
      %cst = arith.constant dense<0.000000e+00> : vector<8x32xf32>
      %14 = tpu.matmul %12, %13, %cst {dimension_numbers = #tpu.dot_dimension_numbers<[1], [0], [0], [1], [0, 0, 1, 1], [], []>} : vector<8x32xf32>, vector<32x32xf32>, vector<8x32xf32> -> vector<8x32xf32>
      %c0_14 = arith.constant 0 : index
      %c0_15 = arith.constant 0 : index
      %15 = vector.load %arg7[%c0_14, %c0_15] : memref<1x32xf32, #tpu.memory_space<vmem>>, vector<1x32xf32>
      %16 = vector.broadcast %15 : vector<1x32xf32> to vector<8x32xf32>
      %17 = arith.addf %14, %16 : vector<8x32xf32>
      %18 = math.tanh %17 : vector<8x32xf32>
      %c0_16 = arith.constant 0 : index
      %c0_17 = arith.constant 0 : index
      %19 = vector.load %arg3[%c0_16, %c0_17] : memref<8x32xf32, #tpu.memory_space<vmem>>, vector<8x32xf32>
      %c0_18 = arith.constant 0 : index
      %c0_19 = arith.constant 0 : index
      %20 = vector.load %arg8[%c0_18, %c0_19] : memref<32x32xf32, #tpu.memory_space<vmem>>, vector<32x32xf32>
      %cst_20 = arith.constant dense<0.000000e+00> : vector<8x32xf32>
      %21 = tpu.matmul %19, %20, %cst_20 {dimension_numbers = #tpu.dot_dimension_numbers<[1], [0], [0], [1], [0, 0, 1, 1], [], []>} : vector<8x32xf32>, vector<32x32xf32>, vector<8x32xf32> -> vector<8x32xf32>
      %c0_21 = arith.constant 0 : index
      %c0_22 = arith.constant 0 : index
      %22 = vector.load %arg9[%c0_21, %c0_22] : memref<1x32xf32, #tpu.memory_space<vmem>>, vector<1x32xf32>
      %23 = vector.broadcast %22 : vector<1x32xf32> to vector<8x32xf32>
      %24 = arith.addf %21, %23 : vector<8x32xf32>
      %25 = math.tanh %24 : vector<8x32xf32>
      %c0_23 = arith.constant 0 : index
      %c0_24 = arith.constant 0 : index
      %26 = vector.load %arg10[%c0_23, %c0_24] : memref<2x32xf32, #tpu.memory_space<vmem>>, vector<1x32xf32>
      %27 = vector.broadcast %26 : vector<1x32xf32> to vector<8x32xf32>
      %28 = arith.mulf %18, %27 : vector<8x32xf32>
      %c1 = arith.constant 1 : index
      %c0_25 = arith.constant 0 : index
      %29 = vector.load %arg10[%c1, %c0_25] : memref<2x32xf32, #tpu.memory_space<vmem>>, vector<1x32xf32>
      %30 = vector.broadcast %29 : vector<1x32xf32> to vector<8x32xf32>
      %31 = arith.mulf %25, %30 : vector<8x32xf32>
      %32 = arith.addf %28, %31 : vector<8x32xf32>
      %cst_26 = arith.constant dense<0.000000e+00> : vector<8xf32>
      %33 = vector.multi_reduction <add>, %32, %cst_26 [1] : vector<8x32xf32> to vector<8xf32>
      %34 = vector.shape_cast %33 : vector<8xf32> to vector<8x1xf32>
      %c0_27 = arith.constant 0 : index
      %c0_28 = arith.constant 0 : index
      %35 = memref.load %arg11[%c0_27, %c0_28] : memref<1x1xf32, #tpu.memory_space<smem>>
      %36 = vector.broadcast %35 : f32 to vector<8x1xf32>
      %37 = arith.addf %34, %36 : vector<8x1xf32>
      %38 = arith.negf %37 : vector<8x1xf32>
      %39 = math.exp %38 : vector<8x1xf32>
      %cst_29 = arith.constant 1.000000e+00 : f32
      %40 = vector.broadcast %cst_29 : f32 to vector<8x1xf32>
      %41 = arith.addf %40, %39 : vector<8x1xf32>
      %42 = arith.divf %40, %41 : vector<8x1xf32>
      %c0_30 = arith.constant 0 : index
      %c0_31 = arith.constant 0 : index
      %43 = vector.load %arg14[%c0_30, %c0_31] : memref<8x1xf32, #tpu.memory_space<vmem>>, vector<8x1xf32>
      tpu.vector_store %arg14[%c0_30, %c0_31], %42 {strides = array<i32>} : memref<8x1xf32, #tpu.memory_space<vmem>>, vector<8x1xf32>,
    } else {
    }
    %c0 = arith.constant 0 : index
    %c0_1 = arith.constant 0 : index
    %3 = vector.load %arg14[%c0, %c0_1] : memref<8x1xf32, #tpu.memory_space<vmem>>, vector<8x1xf32>
    %c0_2 = arith.constant 0 : index
    %c0_3 = arith.constant 0 : index
    %4 = vector.load %arg13[%c0_2, %c0_3] : memref<8x1xf32, #tpu.memory_space<vmem>>, vector<8x1xf32>
    tpu.vector_store %arg13[%c0_2, %c0_3], %3 {strides = array<i32>} : memref<8x1xf32, #tpu.memory_space<vmem>>, vector<8x1xf32>,
    %c0_4 = arith.constant 0 : index
    %c0_5 = arith.constant 0 : index
    %5 = vector.load %arg4[%c0_4, %c0_5] : memref<8x8xf32, #tpu.memory_space<vmem>>, vector<8x8xf32>
    %c0_6 = arith.constant 0 : index
    %c0_7 = arith.constant 0 : index
    %6 = vector.load %arg5[%c0_6, %c0_7] : memref<8x8xf32, #tpu.memory_space<vmem>>, vector<8x8xf32>
    %7 = arith.subf %5, %6 : vector<8x8xf32>
    %8 = vector.broadcast %3 : vector<8x1xf32> to vector<8x8xf32>
    %9 = arith.mulf %8, %7 : vector<8x8xf32>
    %10 = arith.addf %6, %9 : vector<8x8xf32>
    %c0_8 = arith.constant 0 : index
    %c0_9 = arith.constant 0 : index
    %11 = vector.load %arg12[%c0_8, %c0_9] : memref<8x8xf32, #tpu.memory_space<vmem>>, vector<8x8xf32>
    tpu.vector_store %arg12[%c0_8, %c0_9], %10 {strides = array<i32>} : memref<8x8xf32, #tpu.memory_space<vmem>>, vector<8x8xf32>,
    return
  }
  func.func @transform_0(%arg0: i32, %arg1: i32) -> (i32, i32) {
    %c0_i32 = arith.constant 0 : i32
    %c0_i32_0 = arith.constant 0 : i32
    return %arg0, %c0_i32 : i32, i32
  }
  func.func @transform_1(%arg0: i32, %arg1: i32) -> (i32, i32) {
    %c0_i32 = arith.constant 0 : i32
    %c0_i32_0 = arith.constant 0 : i32
    return %arg0, %c0_i32 : i32, i32
  }
  func.func @transform_2(%arg0: i32, %arg1: i32) -> (i32, i32) {
    %c0_i32 = arith.constant 0 : i32
    return %arg0, %arg1 : i32, i32
  }
  func.func @transform_3(%arg0: i32, %arg1: i32) -> (i32, i32) {
    %c0_i32 = arith.constant 0 : i32
    return %arg0, %arg1 : i32, i32
  }
  func.func @transform_4(%arg0: i32, %arg1: i32) -> (i32, i32) {
    %c0_i32 = arith.constant 0 : i32
    %c0_i32_0 = arith.constant 0 : i32
    %c0_i32_1 = arith.constant 0 : i32
    return %c0_i32, %c0_i32_0 : i32, i32
  }
  func.func @transform_5(%arg0: i32, %arg1: i32) -> (i32, i32) {
    %c0_i32 = arith.constant 0 : i32
    %c0_i32_0 = arith.constant 0 : i32
    %c0_i32_1 = arith.constant 0 : i32
    return %c0_i32, %c0_i32_0 : i32, i32
  }
  func.func @transform_6(%arg0: i32, %arg1: i32) -> (i32, i32) {
    %c0_i32 = arith.constant 0 : i32
    %c0_i32_0 = arith.constant 0 : i32
    %c0_i32_1 = arith.constant 0 : i32
    return %c0_i32, %c0_i32_0 : i32, i32
  }
  func.func @transform_7(%arg0: i32, %arg1: i32) -> (i32, i32) {
    %c0_i32 = arith.constant 0 : i32
    %c0_i32_0 = arith.constant 0 : i32
    %c0_i32_1 = arith.constant 0 : i32
    return %c0_i32, %c0_i32_0 : i32, i32
  }
  func.func @transform_8(%arg0: i32, %arg1: i32) -> (i32, i32) {
    %c0_i32 = arith.constant 0 : i32
    %c0_i32_0 = arith.constant 0 : i32
    %c0_i32_1 = arith.constant 0 : i32
    return %c0_i32, %c0_i32_0 : i32, i32
  }
  func.func @transform_9(%arg0: i32, %arg1: i32) -> (i32, i32) {
    %c0_i32 = arith.constant 0 : i32
    %c0_i32_0 = arith.constant 0 : i32
    %c0_i32_1 = arith.constant 0 : i32
    return %c0_i32, %c0_i32_0 : i32, i32
  }
  func.func @transform_10(%arg0: i32, %arg1: i32) -> (i32, i32) {
    %c0_i32 = arith.constant 0 : i32
    return %arg0, %arg1 : i32, i32
  }
  func.func @transform_11(%arg0: i32, %arg1: i32) -> (i32, i32) {
    %c0_i32 = arith.constant 0 : i32
    %c0_i32_0 = arith.constant 0 : i32
    return %arg0, %c0_i32 : i32, i32
  }
}

</mosaic_0001>

<llo_original>
// kernel: tpu_custom_call.1
$region0: #{tpu_custom_call.1}
  #allocation0 [shape = 'u32[]', space=smem, size = 0x4, offset = 0x4, fixed_abs, tag = 'smem constant byte address 0x4 - core index']
  #allocation1 [shape = 'u32[144,128]{1,0:T(1,128)}', space=vmem, size = 0x12000, scoped, tag = 'internal scratch']
  #allocation2 [shape = 'f32[8,1]{1,0:T(8,128)}', space=vmem, size = 0x1000, scoped, tag = 'scratch operand']
  #allocation3 [shape = 'f32[1,1]{1,0:T(1,128)S(6)}', space=smem, size = 0x200, scoped, tag = 'scoped memory for tpu_custom_call.1']
  %s0 = inlined_call_operand.hbm [shape: f32[16,32], index: 0, kind: input, shape index: {}]
  %s1 = inlined_call_operand.hbm [shape: f32[16,32], index: 1, kind: input, shape index: {}]
  %s2 = inlined_call_operand.vmem [shape: f32[16,8], index: 2, kind: input, shape index: {}]
  %s3 = inlined_call_operand.vmem [shape: f32[16,8], index: 3, kind: input, shape index: {}]
  %s4 = inlined_call_operand.vmem [shape: f32[32,32], index: 4, kind: input, shape index: {}]
  %s5 = inlined_call_operand.vmem [shape: f32[1,32], index: 5, kind: input, shape index: {}]
  %s6 = inlined_call_operand.vmem [shape: f32[32,32], index: 6, kind: input, shape index: {}]
  %s7 = inlined_call_operand.vmem [shape: f32[1,32], index: 7, kind: input, shape index: {}]
  %s8 = inlined_call_operand.vmem [shape: f32[2,32], index: 8, kind: input, shape index: {}]
  %s9 = inlined_call_operand.<no memory space> [shape: f32[1,1], index: 9, kind: input, shape index: {}]
  %s10 = inlined_call_operand.vmem [shape: f32[16,8], index: 10, kind: output, shape index: {0}]
  %s11 = inlined_call_operand.vmem [shape: f32[16,1], index: 11, kind: output, shape index: {1}]
  %12 = xla_tuple %s10, %s11
  %s13 = sld [smem:[#allocation0]]
  $region93: #{tpu_custom_call.1} parent=0
    _
  %s15 = ssub.s32 1, %s13
  %s16 = scalar_select 0, %s15, %s13
  %17 = sst [smem:[#allocation3]] %s9
  $region1: #{tpu_custom_call.1} parent=0
    #allocation4 [shape = 'u8[8192]{0}', space=vmem, size = 0x2000, scoped, tag = 'input window, operand 0']
    #allocation5 [shape = 's32[2]{0}', space=sflag, size = 0x8, scoped, tag = 'scoped memory for tpu_custom_call.1']
    #allocation6 [shape = 'u8[8192]{0}', space=vmem, size = 0x2000, scoped, tag = 'input window, operand 1']
    #allocation7 [shape = 's32[2]{0}', space=sflag, size = 0x8, scoped, tag = 'scoped memory for tpu_custom_call.1']
    %18 = vsyncpa [#allocation5], 0
    %s19 = scalar_lea.sflag [#allocation5], 1
    %20 = vsyncpa %s19, 0
    %21 = vsyncpa [#allocation7], 0
    %s22 = scalar_lea.sflag [#allocation7], 1
    %23 = vsyncpa %s22, 0
    loop: start=0, step=1, limit=4
    $region2: #{tpu_custom_call.1} parent=1 // loop_pre_header
      _
    $region3: #{tpu_custom_call.1} parent=1 // loop_header
      %s25 = sphi 0, %s29
      %p26 = scmp.ge.s32.totalorder %s25, 4
      %s32 = sphi 0, %s44
      %s33 = sphi 0, %s40
      %s34 = sphi 0, %s32
      %s35 = sphi 0, %s33
      %s36 = sphi 0, %s34
      %s37 = sphi 0, %s35
      %s47 = sphi 0, %s49
      %s50 = sphi 0, %s47
      %s51 = sphi 0, %s50
      %s67 = sphi 0, %s51
      %s73 = sphi 0, %s75
      %s76 = sphi 0, %s73
      %s77 = sphi 0, %s76
      %s93 = sphi 0, %s77
      %s101 = sphi 0, %s103
      %s104 = sphi 0, %s101
      %s105 = sphi 0, %s104
      %s121 = sphi 0, %s105
      %s129 = sphi 0, %s131
      %s132 = sphi 0, %s129
      %s133 = sphi 0, %s132
      %s149 = sphi 0, %s133
      %s153 = sphi 0, %s153
      %s155 = sphi 0, %s153
      %s156 = sphi 0, %s155
      %s170 = sphi 0, %s156
      %s174 = sphi 0, %s174
      %s176 = sphi 0, %s174
      %s177 = sphi 0, %s176
      %s191 = sphi 0, %s177
      %s195 = sphi 0, %s195
      %s197 = sphi 0, %s195
      %s198 = sphi 0, %s197
      %s212 = sphi 0, %s198
      %s216 = sphi 0, %s216
      %s218 = sphi 0, %s216
      %s219 = sphi 0, %s218
      %s233 = sphi 0, %s219
      %s237 = sphi 0, %s237
      %s239 = sphi 0, %s237
      %s240 = sphi 0, %s239
      %s254 = sphi 0, %s240
      %s258 = sphi 0, %s258
      %s260 = sphi 0, %s258
      %s261 = sphi 0, %s260
      %s275 = sphi 0, %s261
      %s283 = sphi 0, %s285
      %s286 = sphi 0, %s283
      %s287 = sphi 0, %s286
      %s303 = sphi 0, %s287
      %s309 = sphi 0, %s311
      %s312 = sphi 0, %s309
      %s313 = sphi 0, %s312
      %s329 = sphi 0, %s313
    $region4: #{tpu_custom_call.1} parent=1 // loop_header_branch
      %28 = sbr.rel (%p26) target = $region8
    $region5: #{tpu_custom_call.1} parent=1 // loop_body
      %s30 = ssub.s32 %s25, 1
      %s31 = ssub.s32 %s25, 2
      %s38 = sadd.s32 1, %s33
      %p39 = scmp.ge.s32.totalorder %s38, 1
      %s40 = scalar_select %p39, 0, %s38
      %s41 = sadd.s32 1, %s32
      %s42 = scalar_select %p39, %s41, %s32
      %p43 = scmp.ge.s32.totalorder %s42, 2
      %s44 = scalar_select %p43, 0, %s42
      %s45 = ssub.s32 %s32, %s44
      %p46 = scmp.eq.s32.totalorder %s45, 0
      %s48 = sadd.s32 %s47, 1
      %s49 = scalar_select %p46, %s47, %s48
      %p52 = pneg %p46
      %p53 = scmp.eq.s32.totalorder %s25, 1
      %p54 = por %p52, %p53
      %p55 = scmp.ne.s32.totalorder %s47, %s50
      %p56 = scmp.eq.s32.totalorder %s25, 0
      %p57 = por %p55, %p56
      %p58 = scmp.ne.s32.totalorder %s47, %s50
      %p59 = scmp.eq.s32.totalorder %s30, 1
      %p60 = por %p58, %p59
      %p61 = scmp.ne.s32.totalorder %s50, %s51
      %p62 = scmp.eq.s32.totalorder %s30, 0
      %p63 = por %p61, %p62
      %p64 = scmp.ne.s32.totalorder %s50, %s51
      %p65 = scmp.eq.s32.totalorder %s31, 1
      %p66 = por %p64, %p65
      %p68 = scmp.ne.s32.totalorder %s51, %s67
      %p69 = scmp.eq.s32.totalorder %s31, 0
      %p70 = por %p68, %p69
      %s71 = ssub.s32 %s32, %s44
      %p72 = scmp.eq.s32.totalorder %s71, 0
      %s74 = sadd.s32 %s73, 1
      %s75 = scalar_select %p72, %s73, %s74
      %p78 = pneg %p72
      %p79 = scmp.eq.s32.totalorder %s25, 1
      %p80 = por %p78, %p79
      %p81 = scmp.ne.s32.totalorder %s73, %s76
      %p82 = scmp.eq.s32.totalorder %s25, 0
      %p83 = por %p81, %p82
      %p84 = scmp.ne.s32.totalorder %s73, %s76
      %p85 = scmp.eq.s32.totalorder %s30, 1
      %p86 = por %p84, %p85
      %p87 = scmp.ne.s32.totalorder %s76, %s77
      %p88 = scmp.eq.s32.totalorder %s30, 0
      %p89 = por %p87, %p88
      %p90 = scmp.ne.s32.totalorder %s76, %s77
      %p91 = scmp.eq.s32.totalorder %s31, 1
      %p92 = por %p90, %p91
      %p94 = scmp.ne.s32.totalorder %s77, %s93
      %p95 = scmp.eq.s32.totalorder %s31, 0
      %p96 = por %p94, %p95
      %s97 = ssub.s32 %s32, %s44
      %s98 = ssub.s32 %s33, %s40
      %s99 = sor.u32 %s97, %s98
      %p100 = scmp.eq.s32.totalorder %s99, 0
      %s102 = sadd.s32 %s101, 1
      %s103 = scalar_select %p100, %s101, %s102
      %p106 = pneg %p100
      %p107 = scmp.eq.s32.totalorder %s25, 1
      %p108 = por %p106, %p107
      %p109 = scmp.ne.s32.totalorder %s101, %s104
      %p110 = scmp.eq.s32.totalorder %s25, 0
      %p111 = por %p109, %p110
      %p112 = scmp.ne.s32.totalorder %s101, %s104
      %p113 = scmp.eq.s32.totalorder %s30, 1
      %p114 = por %p112, %p113
      %p115 = scmp.ne.s32.totalorder %s104, %s105
      %p116 = scmp.eq.s32.totalorder %s30, 0
      %p117 = por %p115, %p116
      %p118 = scmp.ne.s32.totalorder %s104, %s105
      %p119 = scmp.eq.s32.totalorder %s31, 1
      %p120 = por %p118, %p119
      %p122 = scmp.ne.s32.totalorder %s105, %s121
      %p123 = scmp.eq.s32.totalorder %s31, 0
      %p124 = por %p122, %p123
      %s125 = ssub.s32 %s32, %s44
      %s126 = ssub.s32 %s33, %s40
      %s127 = sor.u32 %s125, %s126
      %p128 = scmp.eq.s32.totalorder %s127, 0
      %s130 = sadd.s32 %s129, 1
      %s131 = scalar_select %p128, %s129, %s130
      %p134 = pneg %p128
      %p135 = scmp.eq.s32.totalorder %s25, 1
      %p136 = por %p134, %p135
      %p137 = scmp.ne.s32.totalorder %s129, %s132
      %p138 = scmp.eq.s32.totalorder %s25, 0
      %p139 = por %p137, %p138
      %p140 = scmp.ne.s32.totalorder %s129, %s132
      %p141 = scmp.eq.s32.totalorder %s30, 1
      %p142 = por %p140, %p141
      %p143 = scmp.ne.s32.totalorder %s132, %s133
      %p144 = scmp.eq.s32.totalorder %s30, 0
      %p145 = por %p143, %p144
      %p146 = scmp.ne.s32.totalorder %s132, %s133
      %p147 = scmp.eq.s32.totalorder %s31, 1
      %p148 = por %p146, %p147
      %p150 = scmp.ne.s32.totalorder %s133, %s149
      %p151 = scmp.eq.s32.totalorder %s31, 0
      %p152 = por %p150, %p151
      %s154 = sadd.s32 %s153, 1
      %p157 = scmp.eq.s32.totalorder %s25, 1
      %p158 = scmp.ne.s32.totalorder %s153, %s155
      %p159 = scmp.eq.s32.totalorder %s25, 0
      %p160 = por %p158, %p159
      %p161 = scmp.ne.s32.totalorder %s153, %s155
      %p162 = scmp.eq.s32.totalorder %s30, 1
      %p163 = por %p161, %p162
      %p164 = scmp.ne.s32.totalorder %s155, %s156
      %p165 = scmp.eq.s32.totalorder %s30, 0
      %p166 = por %p164, %p165
      %p167 = scmp.ne.s32.totalorder %s155, %s156
      %p168 = scmp.eq.s32.totalorder %s31, 1
      %p169 = por %p167, %p168
      %p171 = scmp.ne.s32.totalorder %s156, %s170
      %p172 = scmp.eq.s32.totalorder %s31, 0
      %p173 = por %p171, %p172
      %s175 = sadd.s32 %s174, 1
      %p178 = scmp.eq.s32.totalorder %s25, 1
      %p179 = scmp.ne.s32.totalorder %s174, %s176
      %p180 = scmp.eq.s32.totalorder %s25, 0
      %p181 = por %p179, %p180
      %p182 = scmp.ne.s32.totalorder %s174, %s176
      %p183 = scmp.eq.s32.totalorder %s30, 1
      %p184 = por %p182, %p183
      %p185 = scmp.ne.s32.totalorder %s176, %s177
      %p186 = scmp.eq.s32.totalorder %s30, 0
      %p187 = por %p185, %p186
      %p188 = scmp.ne.s32.totalorder %s176, %s177
      %p189 = scmp.eq.s32.totalorder %s31, 1
      %p190 = por %p188, %p189
      %p192 = scmp.ne.s32.totalorder %s177, %s191
      %p193 = scmp.eq.s32.totalorder %s31, 0
      %p194 = por %p192, %p193
      %s196 = sadd.s32 %s195, 1
      %p199 = scmp.eq.s32.totalorder %s25, 1
      %p200 = scmp.ne.s32.totalorder %s195, %s197
      %p201 = scmp.eq.s32.totalorder %s25, 0
      %p202 = por %p200, %p201
      %p203 = scmp.ne.s32.totalorder %s195, %s197
      %p204 = scmp.eq.s32.totalorder %s30, 1
      %p205 = por %p203, %p204
      %p206 = scmp.ne.s32.totalorder %s197, %s198
      %p207 = scmp.eq.s32.totalorder %s30, 0
      %p208 = por %p206, %p207
      %p209 = scmp.ne.s32.totalorder %s197, %s198
      %p210 = scmp.eq.s32.totalorder %s31, 1
      %p211 = por %p209, %p210
      %p213 = scmp.ne.s32.totalorder %s198, %s212
      %p214 = scmp.eq.s32.totalorder %s31, 0
      %p215 = por %p213, %p214
      %s217 = sadd.s32 %s216, 1
      %p220 = scmp.eq.s32.totalorder %s25, 1
      %p221 = scmp.ne.s32.totalorder %s216, %s218
      %p222 = scmp.eq.s32.totalorder %s25, 0
      %p223 = por %p221, %p222
      %p224 = scmp.ne.s32.totalorder %s216, %s218
      %p225 = scmp.eq.s32.totalorder %s30, 1
      %p226 = por %p224, %p225
      %p227 = scmp.ne.s32.totalorder %s218, %s219
      %p228 = scmp.eq.s32.totalorder %s30, 0
      %p229 = por %p227, %p228
      %p230 = scmp.ne.s32.totalorder %s218, %s219
      %p231 = scmp.eq.s32.totalorder %s31, 1
      %p232 = por %p230, %p231
      %p234 = scmp.ne.s32.totalorder %s219, %s233
      %p235 = scmp.eq.s32.totalorder %s31, 0
      %p236 = por %p234, %p235
      %s238 = sadd.s32 %s237, 1
      %p241 = scmp.eq.s32.totalorder %s25, 1
      %p242 = scmp.ne.s32.totalorder %s237, %s239
      %p243 = scmp.eq.s32.totalorder %s25, 0
      %p244 = por %p242, %p243
      %p245 = scmp.ne.s32.totalorder %s237, %s239
      %p246 = scmp.eq.s32.totalorder %s30, 1
      %p247 = por %p245, %p246
      %p248 = scmp.ne.s32.totalorder %s239, %s240
      %p249 = scmp.eq.s32.totalorder %s30, 0
      %p250 = por %p248, %p249
      %p251 = scmp.ne.s32.totalorder %s239, %s240
      %p252 = scmp.eq.s32.totalorder %s31, 1
      %p253 = por %p251, %p252
      %p255 = scmp.ne.s32.totalorder %s240, %s254
      %p256 = scmp.eq.s32.totalorder %s31, 0
      %p257 = por %p255, %p256
      %s259 = sadd.s32 %s258, 1
      %p262 = scmp.eq.s32.totalorder %s25, 1
      %p263 = scmp.ne.s32.totalorder %s258, %s260
      %p264 = scmp.eq.s32.totalorder %s25, 0
      %p265 = por %p263, %p264
      %p266 = scmp.ne.s32.totalorder %s258, %s260
      %p267 = scmp.eq.s32.totalorder %s30, 1
      %p268 = por %p266, %p267
      %p269 = scmp.ne.s32.totalorder %s260, %s261
      %p270 = scmp.eq.s32.totalorder %s30, 0
      %p271 = por %p269, %p270
      %p272 = scmp.ne.s32.totalorder %s260, %s261
      %p273 = scmp.eq.s32.totalorder %s31, 1
      %p274 = por %p272, %p273
      %p276 = scmp.ne.s32.totalorder %s261, %s275
      %p277 = scmp.eq.s32.totalorder %s31, 0
      %p278 = por %p276, %p277
      %s279 = ssub.s32 %s32, %s44
      %s280 = ssub.s32 %s33, %s40
      %s281 = sor.u32 %s279, %s280
      %p282 = scmp.eq.s32.totalorder %s281, 0
      %s284 = sadd.s32 %s283, 1
      %s285 = scalar_select %p282, %s283, %s284
      %p288 = pneg %p282
      %p289 = scmp.eq.s32.totalorder %s25, 1
      %p290 = por %p288, %p289
      %p291 = scmp.ne.s32.totalorder %s283, %s286
      %p292 = scmp.eq.s32.totalorder %s25, 0
      %p293 = por %p291, %p292
      %p294 = scmp.ne.s32.totalorder %s283, %s286
      %p295 = scmp.eq.s32.totalorder %s30, 1
      %p296 = por %p294, %p295
      %p297 = scmp.ne.s32.totalorder %s286, %s287
      %p298 = scmp.eq.s32.totalorder %s30, 0
      %p299 = por %p297, %p298
      %p300 = scmp.ne.s32.totalorder %s286, %s287
      %p301 = scmp.eq.s32.totalorder %s31, 1
      %p302 = por %p300, %p301
      %p304 = scmp.ne.s32.totalorder %s287, %s303
      %p305 = scmp.eq.s32.totalorder %s31, 0
      %p306 = por %p304, %p305
      %s307 = ssub.s32 %s32, %s44
      %p308 = scmp.eq.s32.totalorder %s307, 0
      %s310 = sadd.s32 %s309, 1
      %s311 = scalar_select %p308, %s309, %s310
      %p314 = pneg %p308
      %p315 = scmp.eq.s32.totalorder %s25, 1
      %p316 = por %p314, %p315
      %p317 = scmp.ne.s32.totalorder %s309, %s312
      %p318 = scmp.eq.s32.totalorder %s25, 0
      %p319 = por %p317, %p318
      %p320 = scmp.ne.s32.totalorder %s309, %s312
      %p321 = scmp.eq.s32.totalorder %s30, 1
      %p322 = por %p320, %p321
      %p323 = scmp.ne.s32.totalorder %s312, %s313
      %p324 = scmp.eq.s32.totalorder %s30, 0
      %p325 = por %p323, %p324
      %p326 = scmp.ne.s32.totalorder %s312, %s313
      %p327 = scmp.eq.s32.totalorder %s31, 1
      %p328 = por %p326, %p327
      %p330 = scmp.ne.s32.totalorder %s313, %s329
      %p331 = scmp.eq.s32.totalorder %s31, 0
      %p332 = por %p330, %p331
      %p333 = scmp.le.s32.totalorder 1, %s25
      %p334 = scmp.lt.s32.totalorder %s25, 3
      %p335 = pnand %p333, %p334
      %p336 = pneg %p335
      // Predicated region
      $region9: #{tpu_custom_call.1} parent=5 // pred_check
        _
      $region10: #{tpu_custom_call.1} parent=5 // pred_check_branch
        %338 = sbr.rel (%p335) target = $region12
      $region11: #{tpu_custom_call.1} parent=5 // pred_region
        %s339 = ssub.s32 %s25, 1
        // Predicated region
        $region13: #{tpu_custom_call.1} parent=11 // pred_check
          %p340 = pneg %p166
        $region14: #{tpu_custom_call.1} parent=11 // pred_check_branch
          %342 = sbr.rel (%p340) target = $region16
        $region15: #{tpu_custom_call.1} parent=11 // pred_region
          _
        $region16: #{tpu_custom_call.1} parent=11 // pred_fallthru
          _
        // Predicated region
        $region17: #{tpu_custom_call.1} parent=11 // pred_check
          %p343 = pneg %p187
        $region18: #{tpu_custom_call.1} parent=11 // pred_check_branch
          %345 = sbr.rel (%p343) target = $region20
        $region19: #{tpu_custom_call.1} parent=11 // pred_region
          _
        $region20: #{tpu_custom_call.1} parent=11 // pred_fallthru
          _
        // Predicated region
        $region21: #{tpu_custom_call.1} parent=11 // pred_check
          %p346 = pneg %p208
        $region22: #{tpu_custom_call.1} parent=11 // pred_check_branch
          %348 = sbr.rel (%p346) target = $region24
        $region23: #{tpu_custom_call.1} parent=11 // pred_region
          _
        $region24: #{tpu_custom_call.1} parent=11 // pred_fallthru
          _
        // Predicated region
        $region25: #{tpu_custom_call.1} parent=11 // pred_check
          %p349 = pneg %p229
        $region26: #{tpu_custom_call.1} parent=11 // pred_check_branch
          %351 = sbr.rel (%p349) target = $region28
        $region27: #{tpu_custom_call.1} parent=11 // pred_region
          _
        $region28: #{tpu_custom_call.1} parent=11 // pred_fallthru
          _
        // Predicated region
        $region29: #{tpu_custom_call.1} parent=11 // pred_check
          %p352 = pneg %p250
        $region30: #{tpu_custom_call.1} parent=11 // pred_check_branch
          %354 = sbr.rel (%p352) target = $region32
        $region31: #{tpu_custom_call.1} parent=11 // pred_region
          _
        $region32: #{tpu_custom_call.1} parent=11 // pred_fallthru
          _
        // Predicated region
        $region33: #{tpu_custom_call.1} parent=11 // pred_check
          %p355 = pneg %p271
        $region34: #{tpu_custom_call.1} parent=11 // pred_check_branch
          %357 = sbr.rel (%p355) target = $region36
        $region35: #{tpu_custom_call.1} parent=11 // pred_region
          _
        $region36: #{tpu_custom_call.1} parent=11 // pred_fallthru
          _
      $region12: #{tpu_custom_call.1} parent=5 // pred_fallthru
        _
      %p358 = scmp.lt.s32.totalorder %s25, 2
      // Predicated region
      $region37: #{tpu_custom_call.1} parent=5 // pred_check
        %p359 = pneg %p358
      $region38: #{tpu_custom_call.1} parent=5 // pred_check_branch
        %361 = sbr.rel (%p359) target = $region40
      $region39: #{tpu_custom_call.1} parent=5 // pred_region
        // Predicated region
        $region41: #{tpu_custom_call.1} parent=39 // pred_check
          %p362 = pneg %p57
        $region42: #{tpu_custom_call.1} parent=39 // pred_check_branch
          %364 = sbr.rel (%p362) target = $region44
        $region43: #{tpu_custom_call.1} parent=39 // pred_region
          %s365 = sand.u32 %s47, 1
          %s366 = scalar_lea.sflag [#allocation5], %s365
          %s367 = sand.u32 %s47, 1
          %s368 = smul.addr %s367, 8
          %s369 = scalar_lea.vmem [#allocation4], %s368
          %s371 = ssub.s32 128, 128
          %372 = vsyncadd %s366, %s371
          %s373 = smul.addr %s32, 128
          %s374 = scalar_lea.hbm %s0, %s373
          %s376 = sshll.u32 %s369, 4
          %s377 = int_to_ptr.vmem [resolvable:$true] %s376
          %379 = dma.hbm_to_vmem [thread:$0]  %s374, 128, %s377, %s366
        $region44: #{tpu_custom_call.1} parent=39 // pred_fallthru
          _
        // Predicated region
        $region45: #{tpu_custom_call.1} parent=39 // pred_check
          %p380 = pneg %p83
        $region46: #{tpu_custom_call.1} parent=39 // pred_check_branch
          %382 = sbr.rel (%p380) target = $region48
        $region47: #{tpu_custom_call.1} parent=39 // pred_region
          %s383 = sand.u32 %s73, 1
          %s384 = scalar_lea.sflag [#allocation7], %s383
          %s385 = sand.u32 %s73, 1
          %s386 = smul.addr %s385, 8
          %s387 = scalar_lea.vmem [#allocation6], %s386
          %s389 = ssub.s32 128, 128
          %390 = vsyncadd %s384, %s389
          %s391 = smul.addr %s32, 128
          %s392 = scalar_lea.hbm %s1, %s391
          %s394 = sshll.u32 %s387, 4
          %s395 = int_to_ptr.vmem [resolvable:$true] %s394
          %397 = dma.hbm_to_vmem [thread:$0]  %s392, 128, %s395, %s384
        $region48: #{tpu_custom_call.1} parent=39 // pred_fallthru
          _
        // Predicated region
        $region49: #{tpu_custom_call.1} parent=39 // pred_check
          %p398 = pneg %p111
        $region50: #{tpu_custom_call.1} parent=39 // pred_check_branch
          %400 = sbr.rel (%p398) target = $region52
        $region51: #{tpu_custom_call.1} parent=39 // pred_region
          %p401 = scmp.lt.s32.totalorder %s32, 1
          %s402 = scalar_select %p401, %s32, 1
          %p403 = scmp.lt.s32.totalorder %s33, 0
          %s404 = scalar_select %p403, %s33, 0
          %s405 = sadd.s32 %s404, %s402
          %s406 = smul.addr %s405, 8
          %s407 = scalar_lea.vmem %s2, %s406
        $region52: #{tpu_custom_call.1} parent=39 // pred_fallthru
          _
        // Predicated region
        $region53: #{tpu_custom_call.1} parent=39 // pred_check
          %p408 = pneg %p139
        $region54: #{tpu_custom_call.1} parent=39 // pred_check_branch
          %410 = sbr.rel (%p408) target = $region56
        $region55: #{tpu_custom_call.1} parent=39 // pred_region
          %p411 = scmp.lt.s32.totalorder %s32, 1
          %s412 = scalar_select %p411, %s32, 1
          %p413 = scmp.lt.s32.totalorder %s33, 0
          %s414 = scalar_select %p413, %s33, 0
          %s415 = sadd.s32 %s414, %s412
          %s416 = smul.addr %s415, 8
          %s417 = scalar_lea.vmem %s3, %s416
        $region56: #{tpu_custom_call.1} parent=39 // pred_fallthru
          _
      $region40: #{tpu_custom_call.1} parent=5 // pred_fallthru
        _
      %p418 = scmp.le.s32.totalorder 1, %s25
      %p419 = scmp.lt.s32.totalorder %s25, 3
      %p420 = pnand %p418, %p419
      %p421 = pneg %p420
      // Predicated region
      $region57: #{tpu_custom_call.1} parent=5 // pred_check
        _
      $region58: #{tpu_custom_call.1} parent=5 // pred_check_branch
        %423 = sbr.rel (%p420) target = $region60
      $region59: #{tpu_custom_call.1} parent=5 // pred_region
        %s424 = ssub.s32 %s25, 1
        %s425 = sand.u32 %s50, 1
        %s426 = scalar_lea.sflag [#allocation5], %s425
        %s427 = sand.u32 %s50, 1
        %s428 = smul.addr %s427, 8
        %s429 = scalar_lea.vmem [#allocation4], %s428
        // Predicated region
        $region61: #{tpu_custom_call.1} parent=59 // pred_check
          %p430 = pneg %p63
        $region62: #{tpu_custom_call.1} parent=59 // pred_check_branch
          %432 = sbr.rel (%p430) target = $region64
        $region63: #{tpu_custom_call.1} parent=59 // pred_region
          %433 = dma.done %s426, 128
        $region64: #{tpu_custom_call.1} parent=59 // pred_fallthru
          _
        %s434 = sand.u32 %s76, 1
        %s435 = scalar_lea.sflag [#allocation7], %s434
        %s436 = sand.u32 %s76, 1
        %s437 = smul.addr %s436, 8
        %s438 = scalar_lea.vmem [#allocation6], %s437
        // Predicated region
        $region65: #{tpu_custom_call.1} parent=59 // pred_check
          %p439 = pneg %p89
        $region66: #{tpu_custom_call.1} parent=59 // pred_check_branch
          %441 = sbr.rel (%p439) target = $region68
        $region67: #{tpu_custom_call.1} parent=59 // pred_region
          %442 = dma.done %s435, 128
        $region68: #{tpu_custom_call.1} parent=59 // pred_fallthru
          _
        %s443 = sand.u32 %s50, 1
        %s444 = scalar_lea.sflag [#allocation5], %s443
        %s445 = sand.u32 %s50, 1
        %s446 = smul.addr %s445, 8
        %s447 = scalar_lea.vmem [#allocation4], %s446
        %p448 = pneg %p63
        %p449 = pneg %p60
        %s450 = sand.u32 %s76, 1
        %s451 = scalar_lea.sflag [#allocation7], %s450
        %s452 = sand.u32 %s76, 1
        %s453 = smul.addr %s452, 8
        %s454 = scalar_lea.vmem [#allocation6], %s453
        %p455 = pneg %p89
        %p456 = pneg %p86
        %p457 = scmp.lt.s32.totalorder %s34, 1
        %s458 = scalar_select %p457, %s34, 1
        %p459 = scmp.lt.s32.totalorder %s35, 0
        %s460 = scalar_select %p459, %s35, 0
        %s461 = sadd.s32 %s460, %s458
        %s462 = smul.addr %s461, 8
        %s463 = scalar_lea.vmem %s2, %s462
        %p464 = pneg %p117
        %p465 = pneg %p114
        %p466 = scmp.lt.s32.totalorder %s34, 1
        %s467 = scalar_select %p466, %s34, 1
        %p468 = scmp.lt.s32.totalorder %s35, 0
        %s469 = scalar_select %p468, %s35, 0
        %s470 = sadd.s32 %s469, %s467
        %s471 = smul.addr %s470, 8
        %s472 = scalar_lea.vmem %s3, %s471
        %p473 = pneg %p145
        %p474 = pneg %p142
        %p475 = pneg %p166
        %p476 = pneg %p163
        %p477 = pneg %p187
        %p478 = pneg %p184
        %p479 = pneg %p208
        %p480 = pneg %p205
        %p481 = pneg %p229
        %p482 = pneg %p226
        %p483 = pneg %p250
        %p484 = pneg %p247
        %p485 = pneg %p271
        %p486 = pneg %p268
        %p487 = pneg %p299
        %p488 = pneg %p296
        %p489 = scmp.lt.s32.totalorder %s34, 1
        %s490 = scalar_select %p489, %s34, 1
        %p491 = scmp.lt.s32.totalorder %s35, 0
        %s492 = scalar_select %p491, %s35, 0
        %s493 = sadd.s32 %s492, %s490
        %s494 = smul.addr %s493, 8
        %s495 = scalar_lea.vmem %s10, %s494
        %p496 = pneg %p325
        %p497 = pneg %p322
        %p498 = scmp.lt.s32.totalorder %s34, 1
        %s499 = scalar_select %p498, %s34, 1
        %s500 = smul.addr %s499, 8
        %s501 = scalar_lea.vmem %s11, %s500
        %p502 = scmp.lt.s32.totalorder %s34, 1
        %s503 = scalar_select %p502, %s34, 1
        %p504 = scmp.lt.s32.totalorder %s35, 0
        %s505 = scalar_select %p504, %s35, 0
        %s506 = sadd.s32 %s505, %s503
        %s507 = smul.addr %s506, 8
        %s508 = scalar_lea.vmem %s2, %s507
        %p509 = scmp.lt.s32.totalorder %s34, 1
        %s510 = scalar_select %p509, %s34, 1
        %p511 = scmp.lt.s32.totalorder %s35, 0
        %s512 = scalar_select %p511, %s35, 0
        %s513 = sadd.s32 %s512, %s510
        %s514 = smul.addr %s513, 8
        %s515 = scalar_lea.vmem %s3, %s514
        %p516 = scmp.lt.s32.totalorder %s34, 1
        %s517 = scalar_select %p516, %s34, 1
        %p518 = scmp.lt.s32.totalorder %s35, 0
        %s519 = scalar_select %p518, %s35, 0
        %s520 = sadd.s32 %s519, %s517
        %s521 = smul.addr %s520, 8
        %s522 = scalar_lea.vmem %s10, %s521
        %p523 = scmp.lt.s32.totalorder %s34, 1
        %s524 = scalar_select %p523, %s34, 1
        %s525 = smul.addr %s524, 8
        %s526 = scalar_lea.vmem %s11, %s525
        %p527 = scmp.eq.s32.totalorder %s35, 0
        // Predicated region
        $region69: #{tpu_custom_call.1} parent=59 // pred_check
          %p528 = pneg %p527
        $region70: #{tpu_custom_call.1} parent=59 // pred_check_branch
          %530 = sbr.rel (%p528) target = $region72
        $region71: #{tpu_custom_call.1} parent=59 // pred_region
          %v531 = vld [vmem:[%s429] sm:$0xff]
          %v532 = vld [vmem:[%s4] sm:$0xff]
          %v533 = vld [vmem:[%s4 + $0x8] sm:$0xff]
          %v534 = vld [vmem:[%s4 + $0x10] sm:$0xff]
          %v535 = vld [vmem:[%s4 + $0x18] sm:$0xff]
          %v536 = vld [vmem:[%s5] sm:$0x1]
          %v538 = vlaneseq
          %v539 = vshrl.u32 %v538, 7
          %v540 = vsub.s32 0, %v539
          %v541 = vrot.slane %v536, %v540
          %vm543 = vcmask 261120
          %v545 = vsel %vm543, %v531, 0
          %547 = vmatprep.subr.mxu0 0.0
          %548 = vmatpush1.msra.mxu0 %v532
          %549 = vmatprep.subr.mxu0 0.0
          %550 = vmatpush1.msra.mxu0 %v533
          %551 = vmatprep.subr.mxu0 0.0
          %552 = vmatpush1.msra.mxu0 %v534
          %553 = vmatprep.subr.mxu0 0.0
          %554 = vmatpush1.msra.mxu0 %v535
          %555 = vmatprep.subr.mxu0 0.0
          %556 = vmatpush1.msra.mxu0 0.0
          %557 = vmatprep.subr.mxu0 0.0
          %558 = vmatpush1.msra.mxu0 0.0
          %559 = vmatprep.subr.mxu0 0.0
          %560 = vmatpush1.msra.mxu0 0.0
          %561 = vmatprep.subr.mxu0 0.0
          %562 = vmatpush1.msra.mxu0 0.0
          %563 = vmatprep.subr.mxu0 0.0
          %564 = vmatpush1.msra.mxu0 0.0
          %565 = vmatprep.subr.mxu0 0.0
          %566 = vmatpush1.msra.mxu0 0.0
          %567 = vmatprep.subr.mxu0 0.0
          %568 = vmatpush1.msra.mxu0 0.0
          %569 = vmatprep.subr.mxu0 0.0
          %570 = vmatpush1.msra.mxu0 0.0
          %571 = vmatprep.subr.mxu0 0.0
          %572 = vmatpush1.msra.mxu0 0.0
          %573 = vmatprep.subr.mxu0 0.0
          %574 = vmatpush1.msra.mxu0 0.0
          %575 = vmatprep.subr.mxu0 0.0
          %576 = vmatpush1.msra.mxu0 0.0
          %577 = vmatprep.subr.mxu0 0.0
          %578 = vmatpush1.msra.mxu0 0.0
          %579 = vmatprep.subr.mxu0 0.0
          %580 = vmatpush1.msra.mxu0 0.0
          %581 = vmatprep.subr.mxu0 0.0
          %582 = vmatpush1.msra.mxu0 0.0
          %583 = vmatprep.subr.mxu0 0.0
          %584 = vmatpush1.msra.mxu0 0.0
          %585 = vmatprep.subr.mxu0 0.0
          %586 = vmatpush1.msra.mxu0 0.0
          %587 = vmatprep.subr.mxu0 0.0
          %588 = vmatpush1.msra.mxu0 0.0
          %589 = vmatprep.subr.mxu0 0.0
          %590 = vmatpush1.msra.mxu0 0.0
          %591 = vmatprep.subr.mxu0 0.0
          %592 = vmatpush1.msra.mxu0 0.0
          %593 = vmatprep.subr.mxu0 0.0
          %594 = vmatpush1.msra.mxu0 0.0
          %595 = vmatprep.subr.mxu0 0.0
          %596 = vmatpush1.msra.mxu0 0.0
          %597 = vmatprep.subr.mxu0 0.0
          %598 = vmatpush1.msra.mxu0 0.0
          %599 = vmatprep.subr.mxu0 0.0
          %600 = vmatpush1.msra.mxu0 0.0
          %601 = vmatprep.subr.mxu0 0.0
          %602 = vmatpush1.msra.mxu0 0.0
          %603 = vmatprep.subr.mxu0 0.0
          %604 = vmatpush1.msra.mxu0 0.0
          %605 = vmatprep.subr.mxu0 0.0
          %606 = vmatpush1.msra.mxu0 0.0
          %607 = vmatprep.subr.mxu0 0.0
          %608 = vmatpush1.msra.mxu0 0.0
          %609 = vmatprep.subr.mxu0 0.0
          %610 = vmatpush1.msra.mxu0 0.0
          %611 = vmatprep.mubr.f32.mxu0 0.0
          %612 = vmatmul.mubr.f32.gmra.mrb[0].mxu0 %v545
          %v613 = vpop.f32.mrb[0].mxu0
          %v614 = vadd.f32 %v541, %v613
          %v615 = vpop.f32.mrb[0].mxu0
          %616 = vdwg.mxu0
          %v617 = vtanh.pop %v614
          %v618 = vld [vmem:[%s438] sm:$0xff]
          %v619 = vld [vmem:[%s6] sm:$0xff]
          %v620 = vld [vmem:[%s6 + $0x8] sm:$0xff]
          %v621 = vld [vmem:[%s6 + $0x10] sm:$0xff]
          %v622 = vld [vmem:[%s6 + $0x18] sm:$0xff]
          %v623 = vld [vmem:[%s7] sm:$0x1]
          %v625 = vlaneseq
          %v626 = vshrl.u32 %v625, 7
          %v627 = vsub.s32 0, %v626
          %v628 = vrot.slane %v623, %v627
          %v631 = vsel %vm543, %v618, 0
          %633 = vmatprep.subr.mxu0 0.0
          %634 = vmatpush1.msra.mxu0 %v619
          %635 = vmatprep.subr.mxu0 0.0
          %636 = vmatpush1.msra.mxu0 %v620
          %637 = vmatprep.subr.mxu0 0.0
          %638 = vmatpush1.msra.mxu0 %v621
          %639 = vmatprep.subr.mxu0 0.0
          %640 = vmatpush1.msra.mxu0 %v622
          %641 = vmatprep.subr.mxu0 0.0
          %642 = vmatpush1.msra.mxu0 0.0
          %643 = vmatprep.subr.mxu0 0.0
          %644 = vmatpush1.msra.mxu0 0.0
          %645 = vmatprep.subr.mxu0 0.0
          %646 = vmatpush1.msra.mxu0 0.0
          %647 = vmatprep.subr.mxu0 0.0
          %648 = vmatpush1.msra.mxu0 0.0
          %649 = vmatprep.subr.mxu0 0.0
          %650 = vmatpush1.msra.mxu0 0.0
          %651 = vmatprep.subr.mxu0 0.0
          %652 = vmatpush1.msra.mxu0 0.0
          %653 = vmatprep.subr.mxu0 0.0
          %654 = vmatpush1.msra.mxu0 0.0
          %655 = vmatprep.subr.mxu0 0.0
          %656 = vmatpush1.msra.mxu0 0.0
          %657 = vmatprep.subr.mxu0 0.0
          %658 = vmatpush1.msra.mxu0 0.0
          %659 = vmatprep.subr.mxu0 0.0
          %660 = vmatpush1.msra.mxu0 0.0
          %661 = vmatprep.subr.mxu0 0.0
          %662 = vmatpush1.msra.mxu0 0.0
          %663 = vmatprep.subr.mxu0 0.0
          %664 = vmatpush1.msra.mxu0 0.0
          %665 = vmatprep.subr.mxu0 0.0
          %666 = vmatpush1.msra.mxu0 0.0
          %667 = vmatprep.subr.mxu0 0.0
          %668 = vmatpush1.msra.mxu0 0.0
          %669 = vmatprep.subr.mxu0 0.0
          %670 = vmatpush1.msra.mxu0 0.0
          %671 = vmatprep.subr.mxu0 0.0
          %672 = vmatpush1.msra.mxu0 0.0
          %673 = vmatprep.subr.mxu0 0.0
          %674 = vmatpush1.msra.mxu0 0.0
          %675 = vmatprep.subr.mxu0 0.0
          %676 = vmatpush1.msra.mxu0 0.0
          %677 = vmatprep.subr.mxu0 0.0
          %678 = vmatpush1.msra.mxu0 0.0
          %679 = vmatprep.subr.mxu0 0.0
          %680 = vmatpush1.msra.mxu0 0.0
          %681 = vmatprep.subr.mxu0 0.0
          %682 = vmatpush1.msra.mxu0 0.0
          %683 = vmatprep.subr.mxu0 0.0
          %684 = vmatpush1.msra.mxu0 0.0
          %685 = vmatprep.subr.mxu0 0.0
          %686 = vmatpush1.msra.mxu0 0.0
          %687 = vmatprep.subr.mxu0 0.0
          %688 = vmatpush1.msra.mxu0 0.0
          %689 = vmatprep.subr.mxu0 0.0
          %690 = vmatpush1.msra.mxu0 0.0
          %691 = vmatprep.subr.mxu0 0.0
          %692 = vmatpush1.msra.mxu0 0.0
          %693 = vmatprep.subr.mxu0 0.0
          %694 = vmatpush1.msra.mxu0 0.0
          %695 = vmatprep.subr.mxu0 0.0
          %696 = vmatpush1.msra.mxu0 0.0
          %697 = vmatprep.mubr.f32.mxu0 0.0
          %698 = vmatmul.mubr.f32.gmra.mrb[0].mxu0 %v631
          %v699 = vpop.f32.mrb[0].mxu0
          %v700 = vadd.f32 %v628, %v699
          %v701 = vpop.f32.mrb[0].mxu0
          %702 = vdwg.mxu0
          %v703 = vtanh.pop %v700
          %v704 = vld [vmem:[%s8] sm:$0x1]
          %v705 = vlaneseq
          %v706 = vshrl.u32 %v705, 7
          %v707 = vsub.s32 0, %v706
          %v708 = vrot.slane %v704, %v707
          %v709 = vmul.f32 %v617, %v708
          %v710 = vld [vmem:[%s8 + $0x1] sm:$0x1]
          %v711 = vlaneseq
          %v712 = vshrl.u32 %v711, 7
          %v713 = vsub.s32 0, %v712
          %v714 = vrot.slane %v710, %v713
          %v715 = vmul.f32 %v703, %v714
          %v716 = vadd.f32 %v709, %v715
          %v717 = vsel %vm543, %v716, 0.0
          %718 = vadd.xlane.f32.xlu0 %v717
          %v719 = vpop.xlane.xlu0 %718
          %s720 = sld [smem:[#allocation3]]
          %v721 = vstv %s720
          %v722 = vadd.f32 %v719, %v721
          %v723 = vxor.u32 %v722, 2147483648
          %v724 = vmul.f32 %v723, 1.442695
          %v725 = vpow.pop %v724
          %v726 = vadd.f32 %v725, 1.0
          %v727 = vrcp.pop %v726
          %v728 = vmul.f32 1.0, %v727
          %vm729 = vcmask 7168
          %730 = vst.msk [vmem:[#allocation2] sm:$0xff] %vm729, %v728
        $region72: #{tpu_custom_call.1} parent=59 // pred_fallthru
          _
        %v731 = vld [vmem:[#allocation2] sm:$0xff]
        %vm732 = vcmask 7168
        %733 = vst.msk [vmem:[%s526] sm:$0xff] %vm732, %v731
        %v734 = vld [vmem:[%s508] sm:$0xff]
        %v735 = vld [vmem:[%s515] sm:$0xff]
        %v736 = vsub.f32 %v734, %v735
        %738 = vset.pattern.permute.xlu0 0
        %739 = vperm.xlu0 %738, %v731
        %v740 = vpop.permute.xlu0 %739
        %v742 = vmul.f32 %v740, %v736
        %v743 = vadd.f32 %v735, %v742
        %vm744 = vcmask 64512
        %745 = vst.msk [vmem:[%s522] sm:$0xff] %vm744, %v743
        %p746 = scmp.lt.s32.totalorder %s34, 1
        %s747 = scalar_select %p746, %s34, 1
        %p748 = scmp.lt.s32.totalorder %s35, 0
        %s749 = scalar_select %p748, %s35, 0
        %s750 = sadd.s32 %s749, %s747
        %s751 = smul.addr %s750, 8
        %s752 = scalar_lea.vmem %s10, %s751
        %p753 = scmp.lt.s32.totalorder %s34, 1
        %s754 = scalar_select %p753, %s34, 1
        %s755 = smul.addr %s754, 8
        %s756 = scalar_lea.vmem %s11, %s755
        // Predicated region
        $region73: #{tpu_custom_call.1} parent=59 // pred_check
          %p757 = pneg %p296
        $region74: #{tpu_custom_call.1} parent=59 // pred_check_branch
          %759 = sbr.rel (%p757) target = $region76
        $region75: #{tpu_custom_call.1} parent=59 // pred_region
          _
        $region76: #{tpu_custom_call.1} parent=59 // pred_fallthru
          _
        // Predicated region
        $region77: #{tpu_custom_call.1} parent=59 // pred_check
          %p760 = pneg %p322
        $region78: #{tpu_custom_call.1} parent=59 // pred_check_branch
          %762 = sbr.rel (%p760) target = $region80
        $region79: #{tpu_custom_call.1} parent=59 // pred_region
          _
        $region80: #{tpu_custom_call.1} parent=59 // pred_fallthru
          _
      $region60: #{tpu_custom_call.1} parent=5 // pred_fallthru
        _
      %p763 = scmp.le.s32.totalorder 2, %s25
      // Predicated region
      $region81: #{tpu_custom_call.1} parent=5 // pred_check
        %p764 = pneg %p763
      $region82: #{tpu_custom_call.1} parent=5 // pred_check_branch
        %766 = sbr.rel (%p764) target = $region84
      $region83: #{tpu_custom_call.1} parent=5 // pred_region
        %s767 = ssub.s32 %s25, 2
        // Predicated region
        $region85: #{tpu_custom_call.1} parent=83 // pred_check
          %p768 = pneg %p302
        $region86: #{tpu_custom_call.1} parent=83 // pred_check_branch
          %770 = sbr.rel (%p768) target = $region88
        $region87: #{tpu_custom_call.1} parent=83 // pred_region
          %p771 = scmp.lt.s32.totalorder %s36, 1
          %s772 = scalar_select %p771, %s36, 1
          %p773 = scmp.lt.s32.totalorder %s37, 0
          %s774 = scalar_select %p773, %s37, 0
          %s775 = sadd.s32 %s774, %s772
          %s776 = smul.addr %s775, 8
          %s777 = scalar_lea.vmem %s10, %s776
        $region88: #{tpu_custom_call.1} parent=83 // pred_fallthru
          _
        // Predicated region
        $region89: #{tpu_custom_call.1} parent=83 // pred_check
          %p778 = pneg %p328
        $region90: #{tpu_custom_call.1} parent=83 // pred_check_branch
          %780 = sbr.rel (%p778) target = $region92
        $region91: #{tpu_custom_call.1} parent=83 // pred_region
          %p781 = scmp.lt.s32.totalorder %s36, 1
          %s782 = scalar_select %p781, %s36, 1
          %s783 = smul.addr %s782, 8
          %s784 = scalar_lea.vmem %s11, %s783
        $region92: #{tpu_custom_call.1} parent=83 // pred_fallthru
          _
      $region84: #{tpu_custom_call.1} parent=5 // pred_fallthru
        _
    $region6: #{tpu_custom_call.1} parent=1 // loop_footer
      %s29 = sadd.s32 1, %s25
    $region7: #{tpu_custom_call.1} parent=1 // loop_footer_branch
      %24 = sbr.rel target = $region3
    $region8: #{tpu_custom_call.1} parent=1 // loop_exit
      _
    %785 = vsyncpa [#allocation5], 1
    %s786 = scalar_lea.sflag [#allocation5], 1
    %787 = vsyncpa %s786, 1
    %788 = vsyncpa [#allocation7], 1
    %s789 = scalar_lea.sflag [#allocation7], 1
    %790 = vsyncpa %s789, 1

</llo_original>
